<compile_context>
chip_gen: v7x
topology: tpu7x:2x2x1
jax: 0.10.0
libtpu: 0.0.40
codegen_flags: <defaults>
</compile_context>

<pallas_src>
import math

import jax
import jax.numpy as jnp
from jax.experimental import pallas as pl
from jax.experimental.pallas import tpu as pltpu

_SQRT_HALF = 0.7071067811865476


def _erf_f32(z):
    # Abramowitz & Stegun 7.1.26 rational approximation, max abs error ~1.5e-7.
    a1, a2, a3, a4, a5 = (0.254829592, -0.284496736, 1.421413741,
                          -1.453152027, 1.061405429)
    p = 0.3275911
    az = jnp.abs(z)
    t = 1.0 / (1.0 + p * az)
    poly = ((((a5 * t + a4) * t + a3) * t + a2) * t + a1) * t
    y = 1.0 - poly * jnp.exp(-az * az)
    return jnp.where(z < 0.0, -y, y)


def _gelu_exact(x):
    # Exact GELU: 0.5 * x * (1 + erf(x / sqrt(2)))  (nn.GELU default, not tanh approx)
    return 0.5 * x * (1.0 + _erf_f32(x * _SQRT_HALF))


def ff_kernel(x_ref, w1_ref, b1_ref, w2_ref, b2_ref, o_ref, acc_ref):
    hk = pl.program_id(1)

    @pl.when(hk == 0)
    def _init():
        acc_ref[...] = jnp.zeros_like(acc_ref)

    # First matmul in the operands' native dtype (bf16 stays bf16 on the MXU),
    # accumulating in f32.  Weights are fed untouched (no per-step casts).
    h = jnp.dot(x_ref[...], w1_ref[...], preferred_element_type=jnp.float32)
    h = _gelu_exact(h + b1_ref[...])          # b1 pre-cast to f32 in the wrapper
    # nn.Dropout == identity in eval mode.
    acc_ref[...] += jnp.dot(h.astype(w2_ref.dtype), w2_ref[...],
                            preferred_element_type=jnp.float32)

    @pl.when(hk == pl.num_programs(1) - 1)
    def _finalize():
        o_ref[...] = (acc_ref[...] + b2_ref[...]).astype(o_ref.dtype)


def _round_up(n, m):
    return ((n + m - 1) // m) * m


def _vmem_limit_bytes():
    cap = 64 << 20                     # conservative default (v7x-sized)
    try:
        cap = int(pltpu.get_tpu_info().vmem_capacity_bytes)
    except Exception:                  # pragma: no cover - info query unavailable
        pass
    # ~96 MiB on v5e/v6e (128 MiB VMEM), ~48 MiB on v7x (64 MiB VMEM).
    return min(int(cap * 3 // 4), 100 << 20)


def _vmem_usage(rt, th, c, x_bytes, w_bytes, out_bytes):
    use = 0
    use += 2 * rt * c * x_bytes              # x row tile, double-buffered
    use += 2 * rt * c * out_bytes            # out row tile, double-buffered
    use += 2 * (c * th + th * c) * w_bytes   # W1/W2 blocks, double-buffered
    use += 2 * (th + c) * 4                  # biases (f32), double-buffered
    use += rt * c * 4                        # f32 accumulator scratch
    use += 3 * rt * th * 4                   # f32 GELU intermediate + temporaries
    return use


def _pick_tiles(rows, c, h, x_bytes, w_bytes, out_bytes, budget,
                max_row_tile=512, hidden_tile=None):
    """Pick (row_tile, hidden_tile): keep rows large, shrink H first (v7x fit)."""
    rt0 = _round_up(min(max_row_tile, _round_up(rows, 8)), 8)
    rt_cands = [rt0] + [r for r in (512, 256, 128, 64, 32, 16, 8) if r < rt0]
    if hidden_tile is not None:
        assert h % hidden_tile == 0, "hidden_tile must divide hidden_channels"
        th_cands = [hidden_tile]
    else:
        # Full H first (weights resident), else lane-dense divisors of H.
        th_cands = [h] + [t for t in range(h - h % 128, 0, -128)
                          if t < h and h % t == 0]
    for rt in rt_cands:
        for th in th_cands:
            if _vmem_usage(rt, th, c, x_bytes, w_bytes, out_bytes) <= budget:
                return rt, th
    return rt_cands[-1], th_cands[-1]


def feed_forward(x, w1, b1, w2, b2, *, max_row_tile=512, hidden_tile=None):
    """x: (..., C); w1: (C, H) (= torch weight1.T); b1: (H,);
    w2: (H, C) (= torch weight2.T); b2: (C,). Returns Linear2(GELU(Linear1(x)))."""
    orig_shape = x.shape
    C = orig_shape[-1]
    H = w1.shape[1]
    assert w1.shape == (C, H) and w2.shape == (H, C)
    assert b1.shape == (H,) and b2.shape == (C,)

    rows = math.prod(orig_shape[:-1])
    x2 = x.reshape(rows, C)
    b1r = b1.astype(jnp.float32).reshape(1, H)   # cast once, outside the kernel
    b2r = b2.astype(jnp.float32).reshape(1, C)

    limit = _vmem_limit_bytes()
    rt, th = _pick_tiles(
        rows, C, H,
        jnp.dtype(x.dtype).itemsize,
        jnp.dtype(w1.dtype).itemsize,
        jnp.dtype(x.dtype).itemsize,
        budget=max(limit - (4 << 20), 8 << 20),
        max_row_tile=max_row_tile,
        hidden_tile=hidden_tile,
    )
    grid = (pl.cdiv(rows, rt), H // th)          # ragged last row block is masked

    out2 = pl.pallas_call(
        ff_kernel,
        out_shape=jax.ShapeDtypeStruct((rows, C), x.dtype),
        grid=grid,
        in_specs=[
            pl.BlockSpec((rt, C), lambda i, h: (i, 0)),   # x rows (revisited over h)
            pl.BlockSpec((C, th), lambda i, h: (0, h)),   # W1 slice (resident if th==H)
            pl.BlockSpec((1, th), lambda i, h: (0, h)),   # b1 slice (f32)
            pl.BlockSpec((th, C), lambda i, h: (h, 0)),   # W2 slice (resident if th==H)
            pl.BlockSpec((1, C), lambda i, h: (0, 0)),    # b2 (f32, resident)
        ],
        out_specs=pl.BlockSpec((rt, C), lambda i, h: (i, 0)),
        scratch_shapes=[pltpu.VMEM((rt, C), jnp.float32)],
        compiler_params=pltpu.CompilerParams(
            dimension_semantics=("parallel", "arbitrary"),
            vmem_limit_bytes=limit,
        ),
    )(x2, w1, b1r, w2, b2r)

    return out2.reshape(orig_shape)


def feed_forward_ref(x, w1, b1, w2, b2):
    hp = jax.lax.Precision.HIGHEST
    h = jnp.dot(x, w1, precision=hp) + b1
    h = 0.5 * h * (1.0 + jax.scipy.special.erf(h * _SQRT_HALF))   # exact GELU
    return jnp.dot(h, w2, precision=hp) + b2


if __name__ == "__main__":
    B, S, C, Hh = 2, 8, 128, 256   # batch, seq, in_channels, hidden_channels

    key = jax.random.PRNGKey(0)
    kx, k1, kb1, k2, kb2 = jax.random.split(key, 5)
    x = jax.random.normal(kx, (B, S, C), dtype=jnp.float32)
    # Weights stored as (in_features, out_features) == torch Linear weight.T.
    w1 = jax.random.normal(k1, (C, Hh), dtype=jnp.float32) / jnp.sqrt(jnp.float32(C))
    b1 = jax.random.normal(kb1, (Hh,), dtype=jnp.float32) * 0.1
    w2 = jax.random.normal(k2, (Hh, C), dtype=jnp.float32) / jnp.sqrt(jnp.float32(Hh))
    b2 = jax.random.normal(kb2, (C,), dtype=jnp.float32) * 0.1

    ref = feed_forward_ref(x, w1, b1, w2, b2)

    # 1) Default path: weights fully VMEM-resident, single hidden block.
    out = jax.block_until_ready(feed_forward(x, w1, b1, w2, b2))
    assert out.shape == (B, S, C)
    err = float(jnp.max(jnp.abs(out - ref)))
    assert jnp.allclose(out, ref, atol=2e-4, rtol=2e-4), f"default path err {err}"

    # 2) Hidden-dim tiled accumulator path (v7x large-H fallback), forced here.
    out_h = jax.block_until_ready(feed_forward(x, w1, b1, w2, b2, hidden_tile=128))
    err_h = float(jnp.max(jnp.abs(out_h - ref)))
    assert jnp.allclose(out_h, ref, atol=2e-4, rtol=2e-4), f"H-tiled path err {err_h}"

    # 3) Ragged row count (rows not divisible by the row tile; no wrapper pad).
    x_r = jax.random.normal(kx, (5, 8, C), dtype=jnp.float32)
    ref_r = feed_forward_ref(x_r, w1, b1, w2, b2)
    out_r = jax.block_until_ready(feed_forward(x_r, w1, b1, w2, b2, max_row_tile=32))
    err_r = float(jnp.max(jnp.abs(out_r - ref_r)))
    assert jnp.allclose(out_r, ref_r, atol=2e-4, rtol=2e-4), f"ragged path err {err_r}"

    # 4) bf16 end-to-end (native-dtype MXU path); loose check vs f32 reference.
    out_b = jax.block_until_ready(feed_forward(
        x.astype(jnp.bfloat16),
        w1.astype(jnp.bfloat16), b1.astype(jnp.bfloat16),
        w2.astype(jnp.bfloat16), b2.astype(jnp.bfloat16)))
    assert out_b.dtype == jnp.bfloat16
    err_b = float(jnp.max(jnp.abs(out_b.astype(jnp.float32) - ref)))
    assert err_b < 0.25, f"bf16 path err {err_b}"

    print("KERNEL_OK")
</pallas_src>

<mosaic_0001>
module attributes {stable_mosaic.version = 11 : i64} {
  func.func @ff_kernel(%arg0: i32, %arg1: i32, %arg2: memref<16x128xf32, #tpu.memory_space<vmem>>, %arg3: memref<128x256xf32, #tpu.memory_space<vmem>>, %arg4: memref<1x256xf32, #tpu.memory_space<vmem>>, %arg5: memref<256x128xf32, #tpu.memory_space<vmem>>, %arg6: memref<1x128xf32, #tpu.memory_space<vmem>>, %arg7: memref<16x128xf32, #tpu.memory_space<vmem>>, %arg8: memref<16x128xf32, #tpu.memory_space<vmem>>) attributes {dimension_semantics = [#tpu.dimension_semantics<parallel>, #tpu.dimension_semantics<arbitrary>], iteration_bounds = array<i64: 1, 1>, scalar_prefetch = 0 : i64, scratch_operands = 1 : i64, tpu.core_type = #tpu.core_type<tc>, window_params = [{transform_indices = @transform_0, window_bounds = array<i64: 16, 128>}, {transform_indices = @transform_1, window_bounds = array<i64: 128, 256>}, {transform_indices = @transform_2, window_bounds = array<i64: 1, 256>}, {transform_indices = @transform_3, window_bounds = array<i64: 256, 128>}, {pipeline_mode = #tpu.pipeline_mode<synchronous>, transform_indices = @transform_4, window_bounds = array<i64: 1, 128>}, {transform_indices = @transform_5, window_bounds = array<i64: 16, 128>}]} {
    %c0_i32 = arith.constant 0 : i32
    %0 = arith.cmpi eq, %arg1, %c0_i32 : i32
    %1 = arith.extui %0 : i1 to i32
    %c0_i32_0 = arith.constant 0 : i32
    %2 = arith.cmpi ne, %1, %c0_i32_0 : i32
    scf.if %2 {
      %cst_30 = arith.constant 0.000000e+00 : f32
      %57 = vector.broadcast %cst_30 : f32 to vector<16x128xf32>
      %c0_31 = arith.constant 0 : index
      %c0_32 = arith.constant 0 : index
      %58 = vector.load %arg8[%c0_31, %c0_32] : memref<16x128xf32, #tpu.memory_space<vmem>>, vector<16x128xf32>
      tpu.vector_store %arg8[%c0_31, %c0_32], %57 {strides = array<i32>} : memref<16x128xf32, #tpu.memory_space<vmem>>, vector<16x128xf32>,
    } else {
    }
    %c0 = arith.constant 0 : index
    %c0_1 = arith.constant 0 : index
    %3 = vector.load %arg2[%c0, %c0_1] : memref<16x128xf32, #tpu.memory_space<vmem>>, vector<16x128xf32>
    %c0_2 = arith.constant 0 : index
    %c0_3 = arith.constant 0 : index
    %4 = vector.load %arg3[%c0_2, %c0_3] : memref<128x256xf32, #tpu.memory_space<vmem>>, vector<128x256xf32>
    %cst = arith.constant dense<0.000000e+00> : vector<16x256xf32>
    %5 = tpu.matmul %3, %4, %cst {dimension_numbers = #tpu.dot_dimension_numbers<[1], [0], [0], [1], [0, 0, 1, 1], [], []>} : vector<16x128xf32>, vector<128x256xf32>, vector<16x256xf32> -> vector<16x256xf32>
    %c0_4 = arith.constant 0 : index
    %c0_5 = arith.constant 0 : index
    %6 = vector.load %arg4[%c0_4, %c0_5] : memref<1x256xf32, #tpu.memory_space<vmem>>, vector<1x256xf32>
    %7 = vector.broadcast %6 : vector<1x256xf32> to vector<16x256xf32>
    %8 = arith.addf %5, %7 : vector<16x256xf32>
    %cst_6 = arith.constant 5.000000e-01 : f32
    %9 = vector.broadcast %cst_6 : f32 to vector<16x256xf32>
    %10 = arith.mulf %9, %8 : vector<16x256xf32>
    %cst_7 = arith.constant 0.707106769 : f32
    %11 = vector.broadcast %cst_7 : f32 to vector<16x256xf32>
    %12 = arith.mulf %8, %11 : vector<16x256xf32>
    %13 = math.absf %12 : vector<16x256xf32>
    %cst_8 = arith.constant 0.327591091 : f32
    %14 = vector.broadcast %cst_8 : f32 to vector<16x256xf32>
    %15 = arith.mulf %14, %13 : vector<16x256xf32>
    %cst_9 = arith.constant 1.000000e+00 : f32
    %16 = vector.broadcast %cst_9 : f32 to vector<16x256xf32>
    %17 = arith.addf %16, %15 : vector<16x256xf32>
    %cst_10 = arith.constant 1.000000e+00 : f32
    %18 = vector.broadcast %cst_10 : f32 to vector<16x256xf32>
    %19 = arith.divf %18, %17 : vector<16x256xf32>
    %cst_11 = arith.constant 1.06140542 : f32
    %20 = vector.broadcast %cst_11 : f32 to vector<16x256xf32>
    %21 = arith.mulf %20, %19 : vector<16x256xf32>
    %cst_12 = arith.constant -1.45315206 : f32
    %22 = vector.broadcast %cst_12 : f32 to vector<16x256xf32>
    %23 = arith.addf %21, %22 : vector<16x256xf32>
    %24 = arith.mulf %23, %19 : vector<16x256xf32>
    %cst_13 = arith.constant 1.42141378 : f32
    %25 = vector.broadcast %cst_13 : f32 to vector<16x256xf32>
    %26 = arith.addf %24, %25 : vector<16x256xf32>
    %27 = arith.mulf %26, %19 : vector<16x256xf32>
    %cst_14 = arith.constant -0.284496725 : f32
    %28 = vector.broadcast %cst_14 : f32 to vector<16x256xf32>
    %29 = arith.addf %27, %28 : vector<16x256xf32>
    %30 = arith.mulf %29, %19 : vector<16x256xf32>
    %cst_15 = arith.constant 0.254829586 : f32
    %31 = vector.broadcast %cst_15 : f32 to vector<16x256xf32>
    %32 = arith.addf %30, %31 : vector<16x256xf32>
    %33 = arith.mulf %32, %19 : vector<16x256xf32>
    %cst_16 = arith.constant 0.000000e+00 : f32
    %34 = vector.broadcast %cst_16 : f32 to vector<16x256xf32>
    %35 = arith.subf %34, %13 : vector<16x256xf32>
    %36 = arith.mulf %35, %13 : vector<16x256xf32>
    %37 = math.exp %36 : vector<16x256xf32>
    %38 = arith.mulf %33, %37 : vector<16x256xf32>
    %cst_17 = arith.constant 1.000000e+00 : f32
    %39 = vector.broadcast %cst_17 : f32 to vector<16x256xf32>
    %40 = arith.subf %39, %38 : vector<16x256xf32>
    %cst_18 = arith.constant 0.000000e+00 : f32
    %41 = vector.broadcast %cst_18 : f32 to vector<16x256xf32>
    %42 = arith.cmpf olt, %12, %41 : vector<16x256xf32>
    %cst_19 = arith.constant 0.000000e+00 : f32
    %43 = vector.broadcast %cst_19 : f32 to vector<16x256xf32>
    %44 = arith.subf %43, %40 : vector<16x256xf32>
    %45 = arith.select %42, %44, %40 : vector<16x256xi1>, vector<16x256xf32>
    %cst_20 = arith.constant 1.000000e+00 : f32
    %46 = vector.broadcast %cst_20 : f32 to vector<16x256xf32>
    %47 = arith.addf %46, %45 : vector<16x256xf32>
    %48 = arith.mulf %10, %47 : vector<16x256xf32>
    %c0_21 = arith.constant 0 : index
    %c0_22 = arith.constant 0 : index
    %49 = vector.load %arg8[%c0_21, %c0_22] : memref<16x128xf32, #tpu.memory_space<vmem>>, vector<16x128xf32>
    %c0_23 = arith.constant 0 : index
    %c0_24 = arith.constant 0 : index
    %50 = vector.load %arg5[%c0_23, %c0_24] : memref<256x128xf32, #tpu.memory_space<vmem>>, vector<256x128xf32>
    %cst_25 = arith.constant dense<0.000000e+00> : vector<16x128xf32>
    %51 = tpu.matmul %48, %50, %cst_25 {dimension_numbers = #tpu.dot_dimension_numbers<[1], [0], [0], [1], [0, 0, 1, 1], [], []>} : vector<16x256xf32>, vector<256x128xf32>, vector<16x128xf32> -> vector<16x128xf32>
    %52 = arith.addf %49, %51 : vector<16x128xf32>
    %c0_26 = arith.constant 0 : index
    %c0_27 = arith.constant 0 : index
    %53 = vector.load %arg8[%c0_26, %c0_27] : memref<16x128xf32, #tpu.memory_space<vmem>>, vector<16x128xf32>
    tpu.vector_store %arg8[%c0_26, %c0_27], %52 {strides = array<i32>} : memref<16x128xf32, #tpu.memory_space<vmem>>, vector<16x128xf32>,
    %c0_i32_28 = arith.constant 0 : i32
    %54 = arith.cmpi eq, %arg1, %c0_i32_28 : i32
    %55 = arith.extui %54 : i1 to i32
    %c0_i32_29 = arith.constant 0 : i32
    %56 = arith.cmpi ne, %55, %c0_i32_29 : i32
    scf.if %56 {
      %c0_30 = arith.constant 0 : index
      %c0_31 = arith.constant 0 : index
      %57 = vector.load %arg8[%c0_30, %c0_31] : memref<16x128xf32, #tpu.memory_space<vmem>>, vector<16x128xf32>
      %c0_32 = arith.constant 0 : index
      %c0_33 = arith.constant 0 : index
      %58 = vector.load %arg6[%c0_32, %c0_33] : memref<1x128xf32, #tpu.memory_space<vmem>>, vector<1x128xf32>
      %59 = vector.broadcast %58 : vector<1x128xf32> to vector<16x128xf32>
      %60 = arith.addf %57, %59 : vector<16x128xf32>
      %c0_34 = arith.constant 0 : index
      %c0_35 = arith.constant 0 : index
      %61 = vector.load %arg7[%c0_34, %c0_35] : memref<16x128xf32, #tpu.memory_space<vmem>>, vector<16x128xf32>
      tpu.vector_store %arg7[%c0_34, %c0_35], %60 {strides = array<i32>} : memref<16x128xf32, #tpu.memory_space<vmem>>, vector<16x128xf32>,
    } else {
    }
    return
  }
  func.func @transform_0(%arg0: i32, %arg1: i32) -> (i32, i32) {
    %c0_i32 = arith.constant 0 : i32
    %c0_i32_0 = arith.constant 0 : i32
    return %arg0, %c0_i32 : i32, i32
  }
  func.func @transform_1(%arg0: i32, %arg1: i32) -> (i32, i32) {
    %c0_i32 = arith.constant 0 : i32
    %c0_i32_0 = arith.constant 0 : i32
    return %c0_i32, %arg1 : i32, i32
  }
  func.func @transform_2(%arg0: i32, %arg1: i32) -> (i32, i32) {
    %c0_i32 = arith.constant 0 : i32
    %c0_i32_0 = arith.constant 0 : i32
    return %c0_i32, %arg1 : i32, i32
  }
  func.func @transform_3(%arg0: i32, %arg1: i32) -> (i32, i32) {
    %c0_i32 = arith.constant 0 : i32
    %c0_i32_0 = arith.constant 0 : i32
    return %arg1, %c0_i32 : i32, i32
  }
  func.func @transform_4(%arg0: i32, %arg1: i32) -> (i32, i32) {
    %c0_i32 = arith.constant 0 : i32
    %c0_i32_0 = arith.constant 0 : i32
    %c0_i32_1 = arith.constant 0 : i32
    return %c0_i32, %c0_i32_0 : i32, i32
  }
  func.func @transform_5(%arg0: i32, %arg1: i32) -> (i32, i32) {
    %c0_i32 = arith.constant 0 : i32
    %c0_i32_0 = arith.constant 0 : i32
    return %arg0, %c0_i32 : i32, i32
  }
}

</mosaic_0001>

<llo_original>
// kernel: tpu_custom_call.1
$region0: #{tpu_custom_call.1}
  #allocation0 [shape = 'u32[]', space=smem, size = 0x4, offset = 0x4, fixed_abs, tag = 'smem constant byte address 0x4 - core index']
  #allocation1 [shape = 'u32[144,128]{1,0:T(1,128)}', space=vmem, size = 0x12000, scoped, tag = 'internal scratch']
  #allocation2 [shape = 'f32[16,128]{1,0:T(8,128)}', space=vmem, size = 0x2000, scoped, tag = 'scratch operand']
  %s0 = inlined_call_operand.hbm [shape: f32[16,128], index: 0, kind: input, shape index: {}]
  %s1 = inlined_call_operand.hbm [shape: f32[128,256], index: 1, kind: input, shape index: {}]
  %s2 = inlined_call_operand.vmem [shape: f32[1,256], index: 2, kind: input, shape index: {}]
  %s3 = inlined_call_operand.hbm [shape: f32[256,128], index: 3, kind: input, shape index: {}]
  %s4 = inlined_call_operand.vmem [shape: f32[1,128], index: 4, kind: input, shape index: {}]
  %s5 = inlined_call_operand.hbm [shape: f32[16,128], index: 5, kind: output, shape index: {}]
  %s6 = sld [smem:[#allocation0]]
  $region50: #{tpu_custom_call.1} parent=0
    _
  %s8 = ssub.s32 1, %s6
  %s9 = scalar_select 0, %s8, %s6
  $region1: #{tpu_custom_call.1} parent=0
    #allocation3 [shape = 'u8[8192]{0}', space=vmem, size = 0x2000, scoped, tag = 'input window, operand 0, single buffered']
    #allocation4 [shape = 's32[1]{0}', space=sflag, size = 0x4, scoped, tag = 'scoped memory for tpu_custom_call.1']
    #allocation5 [shape = 's32[1]{0}', space=sflag, size = 0x4, scoped, tag = 'scoped memory for tpu_custom_call.1']
    #allocation6 [shape = 'u8[131072]{0}', space=vmem, size = 0x20000, scoped, tag = 'input window, operand 1, single buffered']
    #allocation7 [shape = 's32[1]{0}', space=sflag, size = 0x4, scoped, tag = 'scoped memory for tpu_custom_call.1']
    #allocation8 [shape = 'u8[131072]{0}', space=vmem, size = 0x20000, scoped, tag = 'input window, operand 3, single buffered']
    #allocation9 [shape = 'u8[8192]{0}', space=vmem, size = 0x2000, scoped, tag = 'output window, operand 0, single buffered']
    %10 = vsyncpa [#allocation4], 0
    %11 = vsyncpa [#allocation7], 0
    %12 = vsyncpa [#allocation5], 0
    // Predicated region
    $region2: #{tpu_custom_call.1} parent=1 // pred_check
      _
    $region3: #{tpu_custom_call.1} parent=1 // pred_check_branch
      %14 = sbr.rel (0) target = $region5
    $region4: #{tpu_custom_call.1} parent=1 // pred_region
      %s16 = ssub.s32 256, 256
      %17 = vsyncadd [#allocation4], %s16
      %s18 = sshll.u32 [#allocation3], 4
      %s19 = int_to_ptr.vmem [resolvable:$true] %s18
      %24 = dma.hbm_to_vmem [thread:$0]  %s0, 256, %s19, [#allocation4], 128, 128, 8
    $region5: #{tpu_custom_call.1} parent=1 // pred_fallthru
      _
    // Predicated region
    $region6: #{tpu_custom_call.1} parent=1 // pred_check
      _
    $region7: #{tpu_custom_call.1} parent=1 // pred_check_branch
      %26 = sbr.rel (0) target = $region9
    $region8: #{tpu_custom_call.1} parent=1 // pred_region
      %s28 = ssub.s32 4096, 4096
      %29 = vsyncadd [#allocation7], %s28
      %s30 = sshll.u32 [#allocation6], 4
      %s31 = int_to_ptr.vmem [resolvable:$true] %s30
      %36 = dma.hbm_to_vmem [thread:$0]  %s1, 4096, %s31, [#allocation7], 256, 256, 16
    $region9: #{tpu_custom_call.1} parent=1 // pred_fallthru
      _
    // Predicated region
    $region10: #{tpu_custom_call.1} parent=1 // pred_check
      _
    $region11: #{tpu_custom_call.1} parent=1 // pred_check_branch
      %38 = sbr.rel (0) target = $region13
    $region12: #{tpu_custom_call.1} parent=1 // pred_region
      _
    $region13: #{tpu_custom_call.1} parent=1 // pred_fallthru
      _
    // Predicated region
    $region14: #{tpu_custom_call.1} parent=1 // pred_check
      _
    $region15: #{tpu_custom_call.1} parent=1 // pred_check_branch
      %40 = sbr.rel (0) target = $region17
    $region16: #{tpu_custom_call.1} parent=1 // pred_region
      %s42 = ssub.s32 4096, 4096
      %43 = vsyncadd [#allocation7], %s42
      %s44 = sshll.u32 [#allocation8], 4
      %s45 = int_to_ptr.vmem [resolvable:$true] %s44
      %50 = dma.hbm_to_vmem [thread:$0]  %s3, 4096, %s45, [#allocation7], 128, 128, 8
    $region17: #{tpu_custom_call.1} parent=1 // pred_fallthru
      _
    // Predicated region
    $region18: #{tpu_custom_call.1} parent=1 // pred_check
      _
    $region19: #{tpu_custom_call.1} parent=1 // pred_check_branch
      %52 = sbr.rel (0) target = $region21
    $region20: #{tpu_custom_call.1} parent=1 // pred_region
      _
    $region21: #{tpu_custom_call.1} parent=1 // pred_fallthru
      _
    // Predicated region
    $region22: #{tpu_custom_call.1} parent=1 // pred_check
      _
    $region23: #{tpu_custom_call.1} parent=1 // pred_check_branch
      %54 = sbr.rel (0) target = $region25
    $region24: #{tpu_custom_call.1} parent=1 // pred_region
      %55 = dma.done [#allocation4], 256
    $region25: #{tpu_custom_call.1} parent=1 // pred_fallthru
      _
    // Predicated region
    $region26: #{tpu_custom_call.1} parent=1 // pred_check
      _
    $region27: #{tpu_custom_call.1} parent=1 // pred_check_branch
      %57 = sbr.rel (0) target = $region29
    $region28: #{tpu_custom_call.1} parent=1 // pred_region
      %58 = dma.done [#allocation7], 4096
    $region29: #{tpu_custom_call.1} parent=1 // pred_fallthru
      _
    // Predicated region
    $region30: #{tpu_custom_call.1} parent=1 // pred_check
      _
    $region31: #{tpu_custom_call.1} parent=1 // pred_check_branch
      %60 = sbr.rel (0) target = $region33
    $region32: #{tpu_custom_call.1} parent=1 // pred_region
      %61 = dma.done [#allocation7], 4096
    $region33: #{tpu_custom_call.1} parent=1 // pred_fallthru
      _
    %p62 = scmp.eq.s32.totalorder 0, 0
    // Predicated region
    $region34: #{tpu_custom_call.1} parent=1 // pred_check
      %p63 = pneg %p62
    $region35: #{tpu_custom_call.1} parent=1 // pred_check_branch
      %65 = sbr.rel (%p63) target = $region37
    $region36: #{tpu_custom_call.1} parent=1 // pred_region
      %66 = vst [vmem:[#allocation2] sm:$0xff] 0.0
      %67 = vst [vmem:[#allocation2 + $0x8] sm:$0xff] 0.0
    $region37: #{tpu_custom_call.1} parent=1 // pred_fallthru
      _
    %v68 = vld [vmem:[#allocation3] sm:$0xff]
    %v69 = vld [vmem:[#allocation3 + $0x8] sm:$0xff]
    %v70 = vld [vmem:[#allocation6] sm:$0xff]
    %v71 = vld [vmem:[#allocation6 + $0x8] sm:$0xff]
    %v72 = vld [vmem:[#allocation6 + $0x10] sm:$0xff]
    %v73 = vld [vmem:[#allocation6 + $0x18] sm:$0xff]
    %v74 = vld [vmem:[#allocation6 + $0x20] sm:$0xff]
    %v75 = vld [vmem:[#allocation6 + $0x28] sm:$0xff]
    %v76 = vld [vmem:[#allocation6 + $0x30] sm:$0xff]
    %v77 = vld [vmem:[#allocation6 + $0x38] sm:$0xff]
    %v78 = vld [vmem:[#allocation6 + $0x40] sm:$0xff]
    %v79 = vld [vmem:[#allocation6 + $0x48] sm:$0xff]
    %v80 = vld [vmem:[#allocation6 + $0x50] sm:$0xff]
    %v81 = vld [vmem:[#allocation6 + $0x58] sm:$0xff]
    %v82 = vld [vmem:[#allocation6 + $0x60] sm:$0xff]
    %v83 = vld [vmem:[#allocation6 + $0x68] sm:$0xff]
    %v84 = vld [vmem:[#allocation6 + $0x70] sm:$0xff]
    %v85 = vld [vmem:[#allocation6 + $0x78] sm:$0xff]
    %v86 = vld [vmem:[#allocation6 + $0x80] sm:$0xff]
    %v87 = vld [vmem:[#allocation6 + $0x88] sm:$0xff]
    %v88 = vld [vmem:[#allocation6 + $0x90] sm:$0xff]
    %v89 = vld [vmem:[#allocation6 + $0x98] sm:$0xff]
    %v90 = vld [vmem:[#allocation6 + $0xa0] sm:$0xff]
    %v91 = vld [vmem:[#allocation6 + $0xa8] sm:$0xff]
    %v92 = vld [vmem:[#allocation6 + $0xb0] sm:$0xff]
    %v93 = vld [vmem:[#allocation6 + $0xb8] sm:$0xff]
    %v94 = vld [vmem:[#allocation6 + $0xc0] sm:$0xff]
    %v95 = vld [vmem:[#allocation6 + $0xc8] sm:$0xff]
    %v96 = vld [vmem:[#allocation6 + $0xd0] sm:$0xff]
    %v97 = vld [vmem:[#allocation6 + $0xd8] sm:$0xff]
    %v98 = vld [vmem:[#allocation6 + $0xe0] sm:$0xff]
    %v99 = vld [vmem:[#allocation6 + $0xe8] sm:$0xff]
    %v100 = vld [vmem:[#allocation6 + $0xf0] sm:$0xff]
    %v101 = vld [vmem:[#allocation6 + $0xf8] sm:$0xff]
    %v102 = vld [vmem:[%s2] sm:$0x3]
    %v104 = vlaneseq
    %v105 = vshrl.u32 %v104, 7
    %v106 = vsub.s32 0, %v105
    %v107 = vrot.slane %v102, %v106
    %v108 = vlaneseq
    %v109 = vshrl.u32 %v108, 7
    %v110 = vsub.s32 1, %v109
    %v111 = vrot.slane %v102, %v110
    %114 = vmatprep.subr.mxu0 %v71
    %115 = vmatpush1.msra.mxu0 %v70
    %116 = vmatprep.subr.mxu0 %v73
    %117 = vmatpush1.msra.mxu0 %v72
    %118 = vmatprep.subr.mxu0 %v75
    %119 = vmatpush1.msra.mxu0 %v74
    %120 = vmatprep.subr.mxu0 %v77
    %121 = vmatpush1.msra.mxu0 %v76
    %122 = vmatprep.subr.mxu0 %v79
    %123 = vmatpush1.msra.mxu0 %v78
    %124 = vmatprep.subr.mxu0 %v81
    %125 = vmatpush1.msra.mxu0 %v80
    %126 = vmatprep.subr.mxu0 %v83
    %127 = vmatpush1.msra.mxu0 %v82
    %128 = vmatprep.subr.mxu0 %v85
    %129 = vmatpush1.msra.mxu0 %v84
    %130 = vmatprep.subr.mxu0 %v87
    %131 = vmatpush1.msra.mxu0 %v86
    %132 = vmatprep.subr.mxu0 %v89
    %133 = vmatpush1.msra.mxu0 %v88
    %134 = vmatprep.subr.mxu0 %v91
    %135 = vmatpush1.msra.mxu0 %v90
    %136 = vmatprep.subr.mxu0 %v93
    %137 = vmatpush1.msra.mxu0 %v92
    %138 = vmatprep.subr.mxu0 %v95
    %139 = vmatpush1.msra.mxu0 %v94
    %140 = vmatprep.subr.mxu0 %v97
    %141 = vmatpush1.msra.mxu0 %v96
    %142 = vmatprep.subr.mxu0 %v99
    %143 = vmatpush1.msra.mxu0 %v98
    %144 = vmatprep.subr.mxu0 %v101
    %145 = vmatpush1.msra.mxu0 %v100
    %146 = vmatprep.subr.mxu0 0.0
    %147 = vmatpush1.msra.mxu0 0.0
    %148 = vmatprep.subr.mxu0 0.0
    %149 = vmatpush1.msra.mxu0 0.0
    %150 = vmatprep.subr.mxu0 0.0
    %151 = vmatpush1.msra.mxu0 0.0
    %152 = vmatprep.subr.mxu0 0.0
    %153 = vmatpush1.msra.mxu0 0.0
    %154 = vmatprep.subr.mxu0 0.0
    %155 = vmatpush1.msra.mxu0 0.0
    %156 = vmatprep.subr.mxu0 0.0
    %157 = vmatpush1.msra.mxu0 0.0
    %158 = vmatprep.subr.mxu0 0.0
    %159 = vmatpush1.msra.mxu0 0.0
    %160 = vmatprep.subr.mxu0 0.0
    %161 = vmatpush1.msra.mxu0 0.0
    %162 = vmatprep.subr.mxu0 0.0
    %163 = vmatpush1.msra.mxu0 0.0
    %164 = vmatprep.subr.mxu0 0.0
    %165 = vmatpush1.msra.mxu0 0.0
    %166 = vmatprep.subr.mxu0 0.0
    %167 = vmatpush1.msra.mxu0 0.0
    %168 = vmatprep.subr.mxu0 0.0
    %169 = vmatpush1.msra.mxu0 0.0
    %170 = vmatprep.subr.mxu0 0.0
    %171 = vmatpush1.msra.mxu0 0.0
    %172 = vmatprep.subr.mxu0 0.0
    %173 = vmatpush1.msra.mxu0 0.0
    %174 = vmatprep.subr.mxu0 0.0
    %175 = vmatpush1.msra.mxu0 0.0
    %176 = vmatprep.subr.mxu0 0.0
    %177 = vmatpush1.msra.mxu0 0.0
    %178 = vmatprep.mubr.f32.mxu0 0.0
    %179 = vmatmul.mubr.f32.gmra.mrb[0].mxu0 %v68
    %v180 = vpop.f32.mrb[0].mxu0
    %v181 = vadd.f32 %v107, %v180
    %v182 = vpop.f32.mrb[0].mxu0
    %v183 = vadd.f32 %v111, %v182
    %184 = vmatprep.mubr.f32.mxu0 0.0
    %185 = vmatmul.mubr.f32.gmra.mrb[0].mxu0 %v69
    %v186 = vpop.f32.mrb[0].mxu0
    %v187 = vadd.f32 %v107, %v186
    %v188 = vpop.f32.mrb[0].mxu0
    %v189 = vadd.f32 %v111, %v188
    %190 = vdwg.mxu0
    %v191 = vmul.f32 %v181, 0.5
    %v192 = vmul.f32 %v183, 0.5
    %v193 = vmul.f32 %v187, 0.5
    %v194 = vmul.f32 %v189, 0.5
    %v195 = vmul.f32 %v181, 0.70710677
    %v196 = vmul.f32 %v183, 0.70710677
    %v197 = vmul.f32 %v187, 0.70710677
    %v198 = vmul.f32 %v189, 0.70710677
    %v199 = vand.u32 2147483647, %v195
    %v200 = vand.u32 2147483647, %v196
    %v201 = vand.u32 2147483647, %v197
    %v202 = vand.u32 2147483647, %v198
    %v203 = vmul.f32 %v199, 0.3275911
    %v204 = vmul.f32 %v200, 0.3275911
    %v205 = vmul.f32 %v201, 0.3275911
    %v206 = vmul.f32 %v202, 0.3275911
    %v207 = vadd.f32 %v203, 1.0
    %v208 = vadd.f32 %v204, 1.0
    %v209 = vadd.f32 %v205, 1.0
    %v210 = vadd.f32 %v206, 1.0
    %v211 = vrcp.pop %v207
    %v212 = vmul.f32 1.0, %v211
    %v213 = vrcp.pop %v208
    %v214 = vmul.f32 1.0, %v213
    %v215 = vrcp.pop %v209
    %v216 = vmul.f32 1.0, %v215
    %v217 = vrcp.pop %v210
    %v218 = vmul.f32 1.0, %v217
    %v219 = vmul.f32 %v212, 1.0614054
    %v220 = vmul.f32 %v214, 1.0614054
    %v221 = vmul.f32 %v216, 1.0614054
    %v222 = vmul.f32 %v218, 1.0614054
    %v223 = vadd.f32 %v219, -1.4531521
    %v224 = vadd.f32 %v220, -1.4531521
    %v225 = vadd.f32 %v221, -1.4531521
    %v226 = vadd.f32 %v222, -1.4531521
    %v227 = vmul.f32 %v223, %v212
    %v228 = vmul.f32 %v224, %v214
    %v229 = vmul.f32 %v225, %v216
    %v230 = vmul.f32 %v226, %v218
    %v231 = vadd.f32 %v227, 1.4214138
    %v232 = vadd.f32 %v228, 1.4214138
    %v233 = vadd.f32 %v229, 1.4214138
    %v234 = vadd.f32 %v230, 1.4214138
    %v235 = vmul.f32 %v231, %v212
    %v236 = vmul.f32 %v232, %v214
    %v237 = vmul.f32 %v233, %v216
    %v238 = vmul.f32 %v234, %v218
    %v239 = vadd.f32 %v235, -0.28449672
    %v240 = vadd.f32 %v236, -0.28449672
    %v241 = vadd.f32 %v237, -0.28449672
    %v242 = vadd.f32 %v238, -0.28449672
    %v243 = vmul.f32 %v239, %v212
    %v244 = vmul.f32 %v240, %v214
    %v245 = vmul.f32 %v241, %v216
    %v246 = vmul.f32 %v242, %v218
    %v247 = vadd.f32 %v243, 0.2548296
    %v248 = vadd.f32 %v244, 0.2548296
    %v249 = vadd.f32 %v245, 0.2548296
    %v250 = vadd.f32 %v246, 0.2548296
    %v251 = vmul.f32 %v247, %v212
    %v252 = vmul.f32 %v248, %v214
    %v253 = vmul.f32 %v249, %v216
    %v254 = vmul.f32 %v250, %v218
    %v255 = vsub.f32 0.0, %v199
    %v256 = vsub.f32 0.0, %v200
    %v257 = vsub.f32 0.0, %v201
    %v258 = vsub.f32 0.0, %v202
    %v259 = vmul.f32 %v255, %v199
    %v260 = vmul.f32 %v256, %v200
    %v261 = vmul.f32 %v257, %v201
    %v262 = vmul.f32 %v258, %v202
    %v263 = vmul.f32 %v259, 1.442695
    %v264 = vpow.pop %v263
    %v265 = vmul.f32 %v260, 1.442695
    %v266 = vpow.pop %v265
    %v267 = vmul.f32 %v261, 1.442695
    %v268 = vpow.pop %v267
    %v269 = vmul.f32 %v262, 1.442695
    %v270 = vpow.pop %v269
    %v271 = vmul.f32 %v251, %v264
    %v272 = vmul.f32 %v252, %v266
    %v273 = vmul.f32 %v253, %v268
    %v274 = vmul.f32 %v254, %v270
    %v275 = vsub.f32 1.0, %v271
    %v276 = vsub.f32 1.0, %v272
    %v277 = vsub.f32 1.0, %v273
    %v278 = vsub.f32 1.0, %v274
    %vm279 = vcmp.lt.f32.partialorder %v195, 0.0
    %vm280 = vcmp.lt.f32.partialorder %v196, 0.0
    %vm281 = vcmp.lt.f32.partialorder %v197, 0.0
    %vm282 = vcmp.lt.f32.partialorder %v198, 0.0
    %v283 = vsub.f32 0.0, %v275
    %v284 = vsub.f32 0.0, %v276
    %v285 = vsub.f32 0.0, %v277
    %v286 = vsub.f32 0.0, %v278
    %v287 = vsel %vm279, %v283, %v275
    %v288 = vsel %vm280, %v284, %v276
    %v289 = vsel %vm281, %v285, %v277
    %v290 = vsel %vm282, %v286, %v278
    %v291 = vadd.f32 %v287, 1.0
    %v292 = vadd.f32 %v288, 1.0
    %v293 = vadd.f32 %v289, 1.0
    %v294 = vadd.f32 %v290, 1.0
    %v295 = vmul.f32 %v191, %v291
    %v296 = vmul.f32 %v192, %v292
    %v297 = vmul.f32 %v193, %v293
    %v298 = vmul.f32 %v194, %v294
    %v299 = vld [vmem:[#allocation2] sm:$0xff]
    %v300 = vld [vmem:[#allocation2 + $0x8] sm:$0xff]
    %v301 = vld [vmem:[#allocation8] sm:$0xff]
    %v302 = vld [vmem:[#allocation8 + $0x8] sm:$0xff]
    %v303 = vld [vmem:[#allocation8 + $0x10] sm:$0xff]
    %v304 = vld [vmem:[#allocation8 + $0x18] sm:$0xff]
    %v305 = vld [vmem:[#allocation8 + $0x20] sm:$0xff]
    %v306 = vld [vmem:[#allocation8 + $0x28] sm:$0xff]
    %v307 = vld [vmem:[#allocation8 + $0x30] sm:$0xff]
    %v308 = vld [vmem:[#allocation8 + $0x38] sm:$0xff]
    %v309 = vld [vmem:[#allocation8 + $0x40] sm:$0xff]
    %v310 = vld [vmem:[#allocation8 + $0x48] sm:$0xff]
    %v311 = vld [vmem:[#allocation8 + $0x50] sm:$0xff]
    %v312 = vld [vmem:[#allocation8 + $0x58] sm:$0xff]
    %v313 = vld [vmem:[#allocation8 + $0x60] sm:$0xff]
    %v314 = vld [vmem:[#allocation8 + $0x68] sm:$0xff]
    %v315 = vld [vmem:[#allocation8 + $0x70] sm:$0xff]
    %v316 = vld [vmem:[#allocation8 + $0x78] sm:$0xff]
    %v317 = vld [vmem:[#allocation8 + $0x80] sm:$0xff]
    %v318 = vld [vmem:[#allocation8 + $0x88] sm:$0xff]
    %v319 = vld [vmem:[#allocation8 + $0x90] sm:$0xff]
    %v320 = vld [vmem:[#allocation8 + $0x98] sm:$0xff]
    %v321 = vld [vmem:[#allocation8 + $0xa0] sm:$0xff]
    %v322 = vld [vmem:[#allocation8 + $0xa8] sm:$0xff]
    %v323 = vld [vmem:[#allocation8 + $0xb0] sm:$0xff]
    %v324 = vld [vmem:[#allocation8 + $0xb8] sm:$0xff]
    %v325 = vld [vmem:[#allocation8 + $0xc0] sm:$0xff]
    %v326 = vld [vmem:[#allocation8 + $0xc8] sm:$0xff]
    %v327 = vld [vmem:[#allocation8 + $0xd0] sm:$0xff]
    %v328 = vld [vmem:[#allocation8 + $0xd8] sm:$0xff]
    %v329 = vld [vmem:[#allocation8 + $0xe0] sm:$0xff]
    %v330 = vld [vmem:[#allocation8 + $0xe8] sm:$0xff]
    %v331 = vld [vmem:[#allocation8 + $0xf0] sm:$0xff]
    %v332 = vld [vmem:[#allocation8 + $0xf8] sm:$0xff]
    %333 = vmatprep.subr.mxu0 0.0
    %334 = vmatpush1.msra.mxu0 %v301
    %335 = vmatprep.subr.mxu0 0.0
    %336 = vmatpush1.msra.mxu0 %v302
    %337 = vmatprep.subr.mxu0 0.0
    %338 = vmatpush1.msra.mxu0 %v303
    %339 = vmatprep.subr.mxu0 0.0
    %340 = vmatpush1.msra.mxu0 %v304
    %341 = vmatprep.subr.mxu0 0.0
    %342 = vmatpush1.msra.mxu0 %v305
    %343 = vmatprep.subr.mxu0 0.0
    %344 = vmatpush1.msra.mxu0 %v306
    %345 = vmatprep.subr.mxu0 0.0
    %346 = vmatpush1.msra.mxu0 %v307
    %347 = vmatprep.subr.mxu0 0.0
    %348 = vmatpush1.msra.mxu0 %v308
    %349 = vmatprep.subr.mxu0 0.0
    %350 = vmatpush1.msra.mxu0 %v309
    %351 = vmatprep.subr.mxu0 0.0
    %352 = vmatpush1.msra.mxu0 %v310
    %353 = vmatprep.subr.mxu0 0.0
    %354 = vmatpush1.msra.mxu0 %v311
    %355 = vmatprep.subr.mxu0 0.0
    %356 = vmatpush1.msra.mxu0 %v312
    %357 = vmatprep.subr.mxu0 0.0
    %358 = vmatpush1.msra.mxu0 %v313
    %359 = vmatprep.subr.mxu0 0.0
    %360 = vmatpush1.msra.mxu0 %v314
    %361 = vmatprep.subr.mxu0 0.0
    %362 = vmatpush1.msra.mxu0 %v315
    %363 = vmatprep.subr.mxu0 0.0
    %364 = vmatpush1.msra.mxu0 %v316
    %365 = vmatprep.subr.mxu0 0.0
    %366 = vmatpush1.msra.mxu0 %v317
    %367 = vmatprep.subr.mxu0 0.0
    %368 = vmatpush1.msra.mxu0 %v318
    %369 = vmatprep.subr.mxu0 0.0
    %370 = vmatpush1.msra.mxu0 %v319
    %371 = vmatprep.subr.mxu0 0.0
    %372 = vmatpush1.msra.mxu0 %v320
    %373 = vmatprep.subr.mxu0 0.0
    %374 = vmatpush1.msra.mxu0 %v321
    %375 = vmatprep.subr.mxu0 0.0
    %376 = vmatpush1.msra.mxu0 %v322
    %377 = vmatprep.subr.mxu0 0.0
    %378 = vmatpush1.msra.mxu0 %v323
    %379 = vmatprep.subr.mxu0 0.0
    %380 = vmatpush1.msra.mxu0 %v324
    %381 = vmatprep.subr.mxu0 0.0
    %382 = vmatpush1.msra.mxu0 %v325
    %383 = vmatprep.subr.mxu0 0.0
    %384 = vmatpush1.msra.mxu0 %v326
    %385 = vmatprep.subr.mxu0 0.0
    %386 = vmatpush1.msra.mxu0 %v327
    %387 = vmatprep.subr.mxu0 0.0
    %388 = vmatpush1.msra.mxu0 %v328
    %389 = vmatprep.subr.mxu0 0.0
    %390 = vmatpush1.msra.mxu0 %v329
    %391 = vmatprep.subr.mxu0 0.0
    %392 = vmatpush1.msra.mxu0 %v330
    %393 = vmatprep.subr.mxu0 0.0
    %394 = vmatpush1.msra.mxu0 %v331
    %395 = vmatprep.subr.mxu0 0.0
    %396 = vmatpush1.msra.mxu0 %v332
    %397 = vmatprep.mubr.f32.mxu0 %v296
    %398 = vmatmul.mubr.f32.gmra.mrb[0].mxu0 %v295
    %v399 = vpop.f32.mrb[0].mxu0
    %v400 = vadd.f32 0.0, %v399
    %v401 = vpop.f32.mrb[0].mxu0
    %402 = vmatprep.mubr.f32.mxu0 %v298
    %403 = vmatmul.mubr.f32.gmra.mrb[0].mxu0 %v297
    %v404 = vpop.f32.mrb[0].mxu0
    %v405 = vadd.f32 0.0, %v404
    %v406 = vpop.f32.mrb[0].mxu0
    %407 = vdwg.mxu0
    %v408 = vadd.f32 %v299, %v400
    %v409 = vadd.f32 %v300, %v405
    %410 = vst [vmem:[#allocation2] sm:$0xff] %v408
    %411 = vst [vmem:[#allocation2 + $0x8] sm:$0xff] %v409
    // Predicated region
    $region38: #{tpu_custom_call.1} parent=1 // pred_check
      %p412 = pneg %p62
    $region39: #{tpu_custom_call.1} parent=1 // pred_check_branch
      %414 = sbr.rel (%p412) target = $region41
    $region40: #{tpu_custom_call.1} parent=1 // pred_region
      %v415 = vld [vmem:[#allocation2] sm:$0xff]
      %v416 = vld [vmem:[#allocation2 + $0x8] sm:$0xff]
      %v417 = vld [vmem:[%s4] sm:$0x1]
      %v419 = vlaneseq
      %v420 = vshrl.u32 %v419, 7
      %v421 = vsub.s32 0, %v420
      %v422 = vrot.slane %v417, %v421
      %v424 = vadd.f32 %v415, %v422
      %v425 = vadd.f32 %v416, %v422
      %426 = vst [vmem:[#allocation9] sm:$0xff] %v424
      %427 = vst [vmem:[#allocation9 + $0x8] sm:$0xff] %v425
    $region41: #{tpu_custom_call.1} parent=1 // pred_fallthru
      _
    // Predicated region
    $region42: #{tpu_custom_call.1} parent=1 // pred_check
      _
    $region43: #{tpu_custom_call.1} parent=1 // pred_check_branch
      %429 = sbr.rel (0) target = $region45
    $region44: #{tpu_custom_call.1} parent=1 // pred_region
      %s431 = ssub.s32 256, 256
      %432 = vsyncadd [#allocation5], %s431
      %s433 = sshll.u32 [#allocation9], 4
      %s434 = int_to_ptr.vmem [resolvable:$true] %s433
      %439 = dma.vmem_to_hbm [thread:$0]  %s434, 256, %s5, [#allocation5], 128, 128, 8
    $region45: #{tpu_custom_call.1} parent=1 // pred_fallthru
      _
    // Predicated region
    $region46: #{tpu_custom_call.1} parent=1 // pred_check
      _
    $region47: #{tpu_custom_call.1} parent=1 // pred_check_branch
      %441 = sbr.rel (0) target = $region49
    $region48: #{tpu_custom_call.1} parent=1 // pred_region
      %442 = dma.done [#allocation5], 256
    $region49: #{tpu_custom_call.1} parent=1 // pred_fallthru
      _
    %443 = vsyncpa [#allocation4], 1
    %444 = vsyncpa [#allocation7], 1
    %445 = vsyncpa [#allocation5], 1

</llo_original>
